<compile_context>
chip_gen: v6e
topology: v6e:2x2x1
jax: 0.10.0
libtpu: 0.0.40
codegen_flags: <defaults>
</compile_context>

<pallas_src>
import jax
import jax.numpy as jnp
from jax.experimental import pallas as pl
from jax.experimental.pallas import tpu as pltpu

_MiB = 1024 * 1024
_TARGET_BLOCK_IN_BYTES = 2 * _MiB     # aim for >= ~2 MiB of input per grid step
_VMEM_BUDGET_BYTES = 24 * _MiB        # in-flight block footprint cap (safe on v5e/v6e/v7x)
_VMEM_LIMIT_FLOOR = 32 * _MiB
_VMEM_LIMIT_CEIL = 48 * _MiB          # headroom under v7x's 64 MiB physical VMEM
_SPATIAL_TILE = 512                   # tile edge for the large-S fallback path


# ---------------------------------------------------------------------------
# Kernels
# ---------------------------------------------------------------------------
def _sym_slab_kernel(x_ref, o_ref):
    # x_ref / o_ref: (b, H, W) block of whole slabs.
    x = x_ref[...]
    half = jnp.asarray(0.5, dtype=x.dtype)
    o_ref[...] = ((x + jnp.swapaxes(x, 1, 2)) * half).astype(o_ref.dtype)


def _sym_pair_kernel(a_ref, b_ref, o_ref):
    # a_ref: x tile at (n, i, j); b_ref: x tile at (n, j, i); out tile at (n, i, j).
    a = a_ref[...]
    b = b_ref[...]
    half = jnp.asarray(0.5, dtype=a.dtype)
    o_ref[...] = ((a + jnp.swapaxes(b, 1, 2)) * half).astype(o_ref.dtype)


# ---------------------------------------------------------------------------
# Wrapper
# ---------------------------------------------------------------------------
def _round_up(v, m):
    return (v + m - 1) // m * m


def _cdiv(a, b):
    return -(-a // b)


def _vmem_slab_bytes(h, w, itemsize):
    # Footprint of one (h, w) slab in VMEM's (8, 128)-tiled layout.
    return _round_up(h, 8) * _round_up(w, 128) * itemsize


@jax.jit
def enforce_sym(x):
    """x: (N, C, H, W) with H == W  ->  (x + x.permute(0, 1, 3, 2)) / 2."""
    n, c, h, w = x.shape
    if h != w:
        raise ValueError("EnforceSym requires square last-two dims (H == W).")
    if not jnp.issubdtype(x.dtype, jnp.floating):
        raise ValueError("EnforceSym kernel expects a floating-point input.")

    nc = n * c
    itemsize = jnp.dtype(x.dtype).itemsize
    xf = x.reshape(nc, h, w)                       # free, contiguous view

    cost = pl.CostEstimate(
        flops=2 * nc * h * w,
        transcendentals=0,
        bytes_accessed=2 * nc * h * w * itemsize,
    )

    slab_vmem = _vmem_slab_bytes(h, w, itemsize)
    # ~5 slab copies live per slab in a block: in x2 (double buffer),
    # out x2 (double buffer), ~1 transpose temporary.
    fits_whole_slab = 5 * slab_vmem <= _VMEM_BUDGET_BYTES

    if fits_whole_slab:
        # --- primary path: whole-slab blocks, 1-D grid over N*C -------------
        b_target = max(1, _TARGET_BLOCK_IN_BYTES // slab_vmem)
        b_cap = max(1, _VMEM_BUDGET_BYTES // (5 * slab_vmem))
        b = max(1, min(nc, b_target, b_cap))
        if nc >= 2:
            b = min(b, _cdiv(nc, 2))               # keep grid >= 2 (v7x megacore)
        grid = (_cdiv(nc, b),)

        vmem_limit = int(min(_VMEM_LIMIT_CEIL,
                             max(_VMEM_LIMIT_FLOOR, 2 * 5 * b * slab_vmem)))

        out = pl.pallas_call(
            _sym_slab_kernel,
            out_shape=jax.ShapeDtypeStruct((nc, h, w), x.dtype),
            grid=grid,
            in_specs=[pl.BlockSpec((b, h, w), lambda i: (i, 0, 0))],
            out_specs=pl.BlockSpec((b, h, w), lambda i: (i, 0, 0)),
            compiler_params=pltpu.CompilerParams(
                dimension_semantics=("parallel",),
                vmem_limit_bytes=vmem_limit,
            ),
            cost_estimate=cost,
        )(xf)
    else:
        # --- fallback path: 2-D spatial tiling for very large S -------------
        t = min(_SPATIAL_TILE, _round_up(h, 128))
        grid = (nc, _cdiv(h, t), _cdiv(h, t))
        tile_vmem = _round_up(t, 8) * _round_up(t, 128) * itemsize
        # per step: A x2, B x2, out x2, ~1 transpose temp
        vmem_limit = int(min(_VMEM_LIMIT_CEIL,
                             max(_VMEM_LIMIT_FLOOR, 2 * 7 * tile_vmem)))

        out = pl.pallas_call(
            _sym_pair_kernel,
            out_shape=jax.ShapeDtypeStruct((nc, h, w), x.dtype),
            grid=grid,
            in_specs=[
                pl.BlockSpec((1, t, t), lambda s, i, j: (s, i, j)),
                pl.BlockSpec((1, t, t), lambda s, i, j: (s, j, i)),
            ],
            out_specs=pl.BlockSpec((1, t, t), lambda s, i, j: (s, i, j)),
            compiler_params=pltpu.CompilerParams(
                dimension_semantics=("parallel", "parallel", "parallel"),
                vmem_limit_bytes=vmem_limit,
            ),
            cost_estimate=cost,
        )(xf, xf)

    return out.reshape(n, c, h, w)


# ---------------------------------------------------------------------------
# Self-test
# ---------------------------------------------------------------------------
if __name__ == "__main__":
    key = jax.random.PRNGKey(0)
    x = jax.random.normal(key, (2, 4, 16, 16), dtype=jnp.float32)

    out = jax.block_until_ready(enforce_sym(x))

    assert out.shape == x.shape, out.shape
    assert out.dtype == x.dtype

    # Pure-JAX reference of the PyTorch forward.
    ref = (x + jnp.transpose(x, (0, 1, 3, 2))) * 0.5
    err = float(jnp.max(jnp.abs(out - ref)))
    assert jnp.allclose(out, ref, atol=1e-6, rtol=1e-6), err

    # Output must be symmetric in its last two dims.
    assert jnp.allclose(out, jnp.transpose(out, (0, 1, 3, 2)), atol=1e-6)

    print("KERNEL_OK")
</pallas_src>

<mosaic_0001>
module attributes {stable_mosaic.version = 11 : i64} {
  func.func @_sym_slab_kernel(%arg0: i32, %arg1: memref<4x16x16xf32, #tpu.memory_space<vmem>>, %arg2: memref<4x16x16xf32, #tpu.memory_space<vmem>>) attributes {dimension_semantics = [#tpu.dimension_semantics<parallel>], iteration_bounds = array<i64: 2>, scalar_prefetch = 0 : i64, scratch_operands = 0 : i64, tpu.core_type = #tpu.core_type<tc>, window_params = [{transform_indices = @transform_0, window_bounds = array<i64: 4, 16, 16>}, {transform_indices = @transform_1, window_bounds = array<i64: 4, 16, 16>}]} {
    %c0 = arith.constant 0 : index
    %c0_0 = arith.constant 0 : index
    %c0_1 = arith.constant 0 : index
    %0 = vector.load %arg1[%c0, %c0_0, %c0_1] : memref<4x16x16xf32, #tpu.memory_space<vmem>>, vector<4x16x16xf32>
    %1 = tpu.transpose %0, [0, 2, 1] : vector<4x16x16xf32> -> vector<4x16x16xf32>
    %2 = arith.addf %0, %1 : vector<4x16x16xf32>
    %cst = arith.constant 5.000000e-01 : f32
    %3 = vector.broadcast %cst : f32 to vector<4x16x16xf32>
    %4 = arith.mulf %2, %3 : vector<4x16x16xf32>
    %c0_2 = arith.constant 0 : index
    %c0_3 = arith.constant 0 : index
    %c0_4 = arith.constant 0 : index
    %5 = vector.load %arg2[%c0_2, %c0_3, %c0_4] : memref<4x16x16xf32, #tpu.memory_space<vmem>>, vector<4x16x16xf32>
    tpu.vector_store %arg2[%c0_2, %c0_3, %c0_4], %4 {strides = array<i32>} : memref<4x16x16xf32, #tpu.memory_space<vmem>>, vector<4x16x16xf32>,
    return
  }
  func.func @transform_0(%arg0: i32) -> (i32, i32, i32) {
    %c0_i32 = arith.constant 0 : i32
    %c0_i32_0 = arith.constant 0 : i32
    %c0_i32_1 = arith.constant 0 : i32
    return %arg0, %c0_i32, %c0_i32_0 : i32, i32, i32
  }
  func.func @transform_1(%arg0: i32) -> (i32, i32, i32) {
    %c0_i32 = arith.constant 0 : i32
    %c0_i32_0 = arith.constant 0 : i32
    %c0_i32_1 = arith.constant 0 : i32
    return %arg0, %c0_i32, %c0_i32_0 : i32, i32, i32
  }
}

</mosaic_0001>

<llo_original>
// kernel: enforce_sym.1
$region0: #{enforce_sym.1}
  #allocation0 [shape = 'u32[]', space=smem, size = 0x4, offset = 0x4, fixed_abs, tag = 'smem constant byte address 0x4 - core index']
  #allocation1 [shape = 'u32[144,128]{1,0:T(1,128)}', space=vmem, size = 0x12000, scoped, tag = 'internal scratch']
  %s0 = inlined_call_operand.hbm [shape: f32[8,16,16], index: 0, kind: input, shape index: {}]
  %s1 = inlined_call_operand.hbm [shape: f32[8,16,16], index: 1, kind: output, shape index: {}]
  %s2 = sld [smem:[#allocation0]]
  $region41: #{enforce_sym.1} parent=0
    _
  %s4 = ssub.s32 1, %s2
  %s5 = scalar_select 0, %s4, %s2
  $region1: #{enforce_sym.1} parent=0
    #allocation2 [shape = 'u8[65536]{0}', space=vmem, size = 0x10000, scoped, tag = 'input window, operand 0']
    #allocation3 [shape = 's32[2]{0}', space=sflag, size = 0x8, scoped, tag = 'scoped memory for enforce_sym.1']
    #allocation4 [shape = 's32[2]{0}', space=sflag, size = 0x8, scoped, tag = 'scoped memory for enforce_sym.1']
    #allocation5 [shape = 'u8[65536]{0}', space=vmem, size = 0x10000, scoped, tag = 'output window, operand 0']
    %6 = vsyncpa [#allocation3], 0
    %s7 = scalar_lea.sflag [#allocation3], 1
    %8 = vsyncpa %s7, 0
    %9 = vsyncpa [#allocation4], 0
    %s10 = scalar_lea.sflag [#allocation4], 1
    %11 = vsyncpa %s10, 0
    loop: start=0, step=1, limit=4
    $region2: #{enforce_sym.1} parent=1 // loop_pre_header
      _
    $region3: #{enforce_sym.1} parent=1 // loop_header
      %s13 = sphi 0, %s17
      %p14 = scmp.ge.s32.totalorder %s13, 4
      %s23 = sphi 0, %s25
      %s26 = sphi 0, %s23
      %s27 = sphi 0, %s26
      %s43 = sphi 0, %s27
      %s49 = sphi 0, %s51
      %s52 = sphi 0, %s49
      %s53 = sphi 0, %s52
      %s69 = sphi 0, %s53
    $region4: #{enforce_sym.1} parent=1 // loop_header_branch
      %16 = sbr.rel (%p14) target = $region8
    $region5: #{enforce_sym.1} parent=1 // loop_body
      %s18 = ssub.s32 %s13, 1
      %s19 = ssub.s32 %s13, 2
      %s20 = sadd.s32 %s13, 1
      %s21 = ssub.s32 %s13, %s20
      %p22 = scmp.eq.s32.totalorder %s21, 0
      %s24 = sadd.s32 %s23, 1
      %s25 = scalar_select %p22, %s23, %s24
      %p28 = pneg %p22
      %p29 = scmp.eq.s32.totalorder %s13, 1
      %p30 = por %p28, %p29
      %p31 = scmp.ne.s32.totalorder %s23, %s26
      %p32 = scmp.eq.s32.totalorder %s13, 0
      %p33 = por %p31, %p32
      %p34 = scmp.ne.s32.totalorder %s23, %s26
      %p35 = scmp.eq.s32.totalorder %s18, 1
      %p36 = por %p34, %p35
      %p37 = scmp.ne.s32.totalorder %s26, %s27
      %p38 = scmp.eq.s32.totalorder %s18, 0
      %p39 = por %p37, %p38
      %p40 = scmp.ne.s32.totalorder %s26, %s27
      %p41 = scmp.eq.s32.totalorder %s19, 1
      %p42 = por %p40, %p41
      %p44 = scmp.ne.s32.totalorder %s27, %s43
      %p45 = scmp.eq.s32.totalorder %s19, 0
      %p46 = por %p44, %p45
      %s47 = ssub.s32 %s13, %s20
      %p48 = scmp.eq.s32.totalorder %s47, 0
      %s50 = sadd.s32 %s49, 1
      %s51 = scalar_select %p48, %s49, %s50
      %p54 = pneg %p48
      %p55 = scmp.eq.s32.totalorder %s13, 1
      %p56 = por %p54, %p55
      %p57 = scmp.ne.s32.totalorder %s49, %s52
      %p58 = scmp.eq.s32.totalorder %s13, 0
      %p59 = por %p57, %p58
      %p60 = scmp.ne.s32.totalorder %s49, %s52
      %p61 = scmp.eq.s32.totalorder %s18, 1
      %p62 = por %p60, %p61
      %p63 = scmp.ne.s32.totalorder %s52, %s53
      %p64 = scmp.eq.s32.totalorder %s18, 0
      %p65 = por %p63, %p64
      %p66 = scmp.ne.s32.totalorder %s52, %s53
      %p67 = scmp.eq.s32.totalorder %s19, 1
      %p68 = por %p66, %p67
      %p70 = scmp.ne.s32.totalorder %s53, %s69
      %p71 = scmp.eq.s32.totalorder %s19, 0
      %p72 = por %p70, %p71
      %p73 = scmp.le.s32.totalorder 1, %s13
      %p74 = scmp.lt.s32.totalorder %s13, 3
      %p75 = pnand %p73, %p74
      %p76 = pneg %p75
      // Predicated region
      $region9: #{enforce_sym.1} parent=5 // pred_check
        _
      $region10: #{enforce_sym.1} parent=5 // pred_check_branch
        %78 = sbr.rel (%p75) target = $region12
      $region11: #{enforce_sym.1} parent=5 // pred_region
        %s79 = ssub.s32 %s13, 1
      $region12: #{enforce_sym.1} parent=5 // pred_fallthru
        _
      %p80 = scmp.lt.s32.totalorder %s13, 2
      // Predicated region
      $region13: #{enforce_sym.1} parent=5 // pred_check
        %p81 = pneg %p80
      $region14: #{enforce_sym.1} parent=5 // pred_check_branch
        %83 = sbr.rel (%p81) target = $region16
      $region15: #{enforce_sym.1} parent=5 // pred_region
        // Predicated region
        $region17: #{enforce_sym.1} parent=15 // pred_check
          %p84 = pneg %p33
        $region18: #{enforce_sym.1} parent=15 // pred_check_branch
          %86 = sbr.rel (%p84) target = $region20
        $region19: #{enforce_sym.1} parent=15 // pred_region
          %s87 = sand.u32 %s23, 1
          %s88 = scalar_lea.sflag [#allocation3], %s87
          %s89 = sand.u32 %s23, 1
          %s90 = smul.addr %s89, 64
          %s91 = scalar_lea.vmem [#allocation2], %s90
          %s92 = smul.u32 4, %s13
          %s94 = ssub.s32 1024, 1024
          %95 = vsyncadd %s88, %s94
          %s96 = smul.addr %s92, 2
          %s97 = smul.addr %s96, 128
          %s98 = scalar_lea.hbm %s0, %s97
          %s99 = sshll.u32 %s91, 4
          %s100 = int_to_ptr.vmem [resolvable:$true] %s99
          %105 = dma.hbm_to_vmem [thread:$0]  %s98, 1024, %s100, %s88, 128, 128, 8
        $region20: #{enforce_sym.1} parent=15 // pred_fallthru
          _
      $region16: #{enforce_sym.1} parent=5 // pred_fallthru
        _
      %p106 = scmp.le.s32.totalorder 1, %s13
      %p107 = scmp.lt.s32.totalorder %s13, 3
      %p108 = pnand %p106, %p107
      %p109 = pneg %p108
      // Predicated region
      $region21: #{enforce_sym.1} parent=5 // pred_check
        _
      $region22: #{enforce_sym.1} parent=5 // pred_check_branch
        %111 = sbr.rel (%p108) target = $region24
      $region23: #{enforce_sym.1} parent=5 // pred_region
        %s112 = ssub.s32 %s13, 1
        %s113 = sand.u32 %s26, 1
        %s114 = scalar_lea.sflag [#allocation3], %s113
        %s115 = sand.u32 %s26, 1
        %s116 = smul.addr %s115, 64
        %s117 = scalar_lea.vmem [#allocation2], %s116
        // Predicated region
        $region25: #{enforce_sym.1} parent=23 // pred_check
          %p118 = pneg %p39
        $region26: #{enforce_sym.1} parent=23 // pred_check_branch
          %120 = sbr.rel (%p118) target = $region28
        $region27: #{enforce_sym.1} parent=23 // pred_region
          %121 = dma.done %s114, 1024
        $region28: #{enforce_sym.1} parent=23 // pred_fallthru
          _
        %s122 = sand.u32 %s26, 1
        %s123 = scalar_lea.sflag [#allocation3], %s122
        %s124 = sand.u32 %s26, 1
        %s125 = smul.addr %s124, 64
        %s126 = scalar_lea.vmem [#allocation2], %s125
        %p127 = pneg %p39
        %p128 = pneg %p36
        %p129 = pneg %p65
        %p130 = pneg %p62
        %s131 = sand.u32 %s52, 1
        %s132 = scalar_lea.sflag [#allocation4], %s131
        %s133 = sand.u32 %s52, 1
        %s134 = smul.addr %s133, 64
        %s135 = scalar_lea.vmem [#allocation5], %s134
        %s136 = smul.u32 4, %s18
        %s137 = smul.u32 4, %s18
        %v138 = vld [vmem:[%s117] sm:$0xff]
        %v139 = vld [vmem:[%s117 + $0x8] sm:$0xff]
        %v140 = vld [vmem:[%s117 + $0x10] sm:$0xff]
        %v141 = vld [vmem:[%s117 + $0x18] sm:$0xff]
        %v142 = vld [vmem:[%s117 + $0x20] sm:$0xff]
        %v143 = vld [vmem:[%s117 + $0x28] sm:$0xff]
        %v144 = vld [vmem:[%s117 + $0x30] sm:$0xff]
        %v145 = vld [vmem:[%s117 + $0x38] sm:$0xff]
        %146 = vxpose.xlu0.b32.start [1/16] %v138, 128
        %147 = vxpose.xlu0.b32.cont [2/16] %v139, 128
        %148 = vxpose.xlu0.b32.cont [3/16] 0.0, 128
        %149 = vxpose.xlu0.b32.cont [4/16] 0.0, 128
        %150 = vxpose.xlu0.b32.cont [5/16] 0.0, 128
        %151 = vxpose.xlu0.b32.cont [6/16] 0.0, 128
        %152 = vxpose.xlu0.b32.cont [7/16] 0.0, 128
        %153 = vxpose.xlu0.b32.cont [8/16] 0.0, 128
        %154 = vxpose.xlu0.b32.cont [9/16] 0.0, 128
        %155 = vxpose.xlu0.b32.cont [10/16] 0.0, 128
        %156 = vxpose.xlu0.b32.cont [11/16] 0.0, 128
        %157 = vxpose.xlu0.b32.cont [12/16] 0.0, 128
        %158 = vxpose.xlu0.b32.cont [13/16] 0.0, 128
        %159 = vxpose.xlu0.b32.cont [14/16] 0.0, 128
        %160 = vxpose.xlu0.b32.cont [15/16] 0.0, 128
        %161 = vxpose.xlu0.b32.end [16/16] 0.0, 128
        %v162 = vpop.trf.xlu0
        %v163 = vpop.trf.xlu0
        %v164 = vpop.trf.xlu0
        %v165 = vpop.trf.xlu0
        %v166 = vpop.trf.xlu0
        %v167 = vpop.trf.xlu0
        %v168 = vpop.trf.xlu0
        %v169 = vpop.trf.xlu0
        %v170 = vpop.trf.xlu0
        %v171 = vpop.trf.xlu0
        %v172 = vpop.trf.xlu0
        %v173 = vpop.trf.xlu0
        %v174 = vpop.trf.xlu0
        %v175 = vpop.trf.xlu0
        %v176 = vpop.trf.xlu0
        %v177 = vpop.trf.xlu0
        %178 = vxpose.xlu0.b32.start [1/16] %v140, 128
        %179 = vxpose.xlu0.b32.cont [2/16] %v141, 128
        %180 = vxpose.xlu0.b32.cont [3/16] 0.0, 128
        %181 = vxpose.xlu0.b32.cont [4/16] 0.0, 128
        %182 = vxpose.xlu0.b32.cont [5/16] 0.0, 128
        %183 = vxpose.xlu0.b32.cont [6/16] 0.0, 128
        %184 = vxpose.xlu0.b32.cont [7/16] 0.0, 128
        %185 = vxpose.xlu0.b32.cont [8/16] 0.0, 128
        %186 = vxpose.xlu0.b32.cont [9/16] 0.0, 128
        %187 = vxpose.xlu0.b32.cont [10/16] 0.0, 128
        %188 = vxpose.xlu0.b32.cont [11/16] 0.0, 128
        %189 = vxpose.xlu0.b32.cont [12/16] 0.0, 128
        %190 = vxpose.xlu0.b32.cont [13/16] 0.0, 128
        %191 = vxpose.xlu0.b32.cont [14/16] 0.0, 128
        %192 = vxpose.xlu0.b32.cont [15/16] 0.0, 128
        %193 = vxpose.xlu0.b32.end [16/16] 0.0, 128
        %v194 = vpop.trf.xlu0
        %v195 = vpop.trf.xlu0
        %v196 = vpop.trf.xlu0
        %v197 = vpop.trf.xlu0
        %v198 = vpop.trf.xlu0
        %v199 = vpop.trf.xlu0
        %v200 = vpop.trf.xlu0
        %v201 = vpop.trf.xlu0
        %v202 = vpop.trf.xlu0
        %v203 = vpop.trf.xlu0
        %v204 = vpop.trf.xlu0
        %v205 = vpop.trf.xlu0
        %v206 = vpop.trf.xlu0
        %v207 = vpop.trf.xlu0
        %v208 = vpop.trf.xlu0
        %v209 = vpop.trf.xlu0
        %210 = vxpose.xlu0.b32.start [1/16] %v142, 128
        %211 = vxpose.xlu0.b32.cont [2/16] %v143, 128
        %212 = vxpose.xlu0.b32.cont [3/16] 0.0, 128
        %213 = vxpose.xlu0.b32.cont [4/16] 0.0, 128
        %214 = vxpose.xlu0.b32.cont [5/16] 0.0, 128
        %215 = vxpose.xlu0.b32.cont [6/16] 0.0, 128
        %216 = vxpose.xlu0.b32.cont [7/16] 0.0, 128
        %217 = vxpose.xlu0.b32.cont [8/16] 0.0, 128
        %218 = vxpose.xlu0.b32.cont [9/16] 0.0, 128
        %219 = vxpose.xlu0.b32.cont [10/16] 0.0, 128
        %220 = vxpose.xlu0.b32.cont [11/16] 0.0, 128
        %221 = vxpose.xlu0.b32.cont [12/16] 0.0, 128
        %222 = vxpose.xlu0.b32.cont [13/16] 0.0, 128
        %223 = vxpose.xlu0.b32.cont [14/16] 0.0, 128
        %224 = vxpose.xlu0.b32.cont [15/16] 0.0, 128
        %225 = vxpose.xlu0.b32.end [16/16] 0.0, 128
        %v226 = vpop.trf.xlu0
        %v227 = vpop.trf.xlu0
        %v228 = vpop.trf.xlu0
        %v229 = vpop.trf.xlu0
        %v230 = vpop.trf.xlu0
        %v231 = vpop.trf.xlu0
        %v232 = vpop.trf.xlu0
        %v233 = vpop.trf.xlu0
        %v234 = vpop.trf.xlu0
        %v235 = vpop.trf.xlu0
        %v236 = vpop.trf.xlu0
        %v237 = vpop.trf.xlu0
        %v238 = vpop.trf.xlu0
        %v239 = vpop.trf.xlu0
        %v240 = vpop.trf.xlu0
        %v241 = vpop.trf.xlu0
        %242 = vxpose.xlu0.b32.start [1/16] %v144, 128
        %243 = vxpose.xlu0.b32.cont [2/16] %v145, 128
        %244 = vxpose.xlu0.b32.cont [3/16] 0.0, 128
        %245 = vxpose.xlu0.b32.cont [4/16] 0.0, 128
        %246 = vxpose.xlu0.b32.cont [5/16] 0.0, 128
        %247 = vxpose.xlu0.b32.cont [6/16] 0.0, 128
        %248 = vxpose.xlu0.b32.cont [7/16] 0.0, 128
        %249 = vxpose.xlu0.b32.cont [8/16] 0.0, 128
        %250 = vxpose.xlu0.b32.cont [9/16] 0.0, 128
        %251 = vxpose.xlu0.b32.cont [10/16] 0.0, 128
        %252 = vxpose.xlu0.b32.cont [11/16] 0.0, 128
        %253 = vxpose.xlu0.b32.cont [12/16] 0.0, 128
        %254 = vxpose.xlu0.b32.cont [13/16] 0.0, 128
        %255 = vxpose.xlu0.b32.cont [14/16] 0.0, 128
        %256 = vxpose.xlu0.b32.cont [15/16] 0.0, 128
        %257 = vxpose.xlu0.b32.end [16/16] 0.0, 128
        %v258 = vpop.trf.xlu0
        %v259 = vpop.trf.xlu0
        %v260 = vpop.trf.xlu0
        %v261 = vpop.trf.xlu0
        %v262 = vpop.trf.xlu0
        %v263 = vpop.trf.xlu0
        %v264 = vpop.trf.xlu0
        %v265 = vpop.trf.xlu0
        %v266 = vpop.trf.xlu0
        %v267 = vpop.trf.xlu0
        %v268 = vpop.trf.xlu0
        %v269 = vpop.trf.xlu0
        %v270 = vpop.trf.xlu0
        %v271 = vpop.trf.xlu0
        %v272 = vpop.trf.xlu0
        %v273 = vpop.trf.xlu0
        %v274 = vadd.f32 %v138, %v162
        %v275 = vadd.f32 %v139, %v163
        %v276 = vadd.f32 %v140, %v194
        %v277 = vadd.f32 %v141, %v195
        %v278 = vadd.f32 %v142, %v226
        %v279 = vadd.f32 %v143, %v227
        %v280 = vadd.f32 %v144, %v258
        %v281 = vadd.f32 %v145, %v259
        %v282 = vmul.f32 %v274, 0.5
        %v283 = vmul.f32 %v275, 0.5
        %v284 = vmul.f32 %v276, 0.5
        %v285 = vmul.f32 %v277, 0.5
        %v286 = vmul.f32 %v278, 0.5
        %v287 = vmul.f32 %v279, 0.5
        %v288 = vmul.f32 %v280, 0.5
        %v289 = vmul.f32 %v281, 0.5
        %vm290 = vcmask 130048
        %291 = vst.msk [vmem:[%s135] sm:$0xff] %vm290, %v282
        %292 = vst.msk [vmem:[%s135 + $0x8] sm:$0xff] %vm290, %v283
        %293 = vst.msk [vmem:[%s135 + $0x10] sm:$0xff] %vm290, %v284
        %294 = vst.msk [vmem:[%s135 + $0x18] sm:$0xff] %vm290, %v285
        %295 = vst.msk [vmem:[%s135 + $0x20] sm:$0xff] %vm290, %v286
        %296 = vst.msk [vmem:[%s135 + $0x28] sm:$0xff] %vm290, %v287
        %297 = vst.msk [vmem:[%s135 + $0x30] sm:$0xff] %vm290, %v288
        %298 = vst.msk [vmem:[%s135 + $0x38] sm:$0xff] %vm290, %v289
        %s299 = sand.u32 %s52, 1
        %s300 = scalar_lea.sflag [#allocation4], %s299
        %s301 = sand.u32 %s52, 1
        %s302 = smul.addr %s301, 64
        %s303 = scalar_lea.vmem [#allocation5], %s302
        // Predicated region
        $region29: #{enforce_sym.1} parent=23 // pred_check
          %p304 = pneg %p62
        $region30: #{enforce_sym.1} parent=23 // pred_check_branch
          %306 = sbr.rel (%p304) target = $region32
        $region31: #{enforce_sym.1} parent=23 // pred_region
          %s307 = smul.u32 4, %s18
          %s309 = ssub.s32 1024, 1024
          %310 = vsyncadd %s300, %s309
          %s311 = smul.addr %s307, 2
          %s312 = smul.addr %s311, 128
          %s313 = scalar_lea.hbm %s1, %s312
          %s314 = sshll.u32 %s303, 4
          %s315 = int_to_ptr.vmem [resolvable:$true] %s314
          %320 = dma.vmem_to_hbm [thread:$0]  %s315, 1024, %s313, %s300, 128, 128, 8
        $region32: #{enforce_sym.1} parent=23 // pred_fallthru
          _
      $region24: #{enforce_sym.1} parent=5 // pred_fallthru
        _
      %p321 = scmp.le.s32.totalorder 2, %s13
      // Predicated region
      $region33: #{enforce_sym.1} parent=5 // pred_check
        %p322 = pneg %p321
      $region34: #{enforce_sym.1} parent=5 // pred_check_branch
        %324 = sbr.rel (%p322) target = $region36
      $region35: #{enforce_sym.1} parent=5 // pred_region
        %s325 = ssub.s32 %s13, 2
        // Predicated region
        $region37: #{enforce_sym.1} parent=35 // pred_check
          %p326 = pneg %p68
        $region38: #{enforce_sym.1} parent=35 // pred_check_branch
          %328 = sbr.rel (%p326) target = $region40
        $region39: #{enforce_sym.1} parent=35 // pred_region
          %s329 = sand.u32 %s53, 1
          %s330 = scalar_lea.sflag [#allocation4], %s329
          %s331 = sand.u32 %s53, 1
          %s332 = smul.addr %s331, 64
          %s333 = scalar_lea.vmem [#allocation5], %s332
          %334 = dma.done %s330, 1024
        $region40: #{enforce_sym.1} parent=35 // pred_fallthru
          _
      $region36: #{enforce_sym.1} parent=5 // pred_fallthru
        _
    $region6: #{enforce_sym.1} parent=1 // loop_footer
      %s17 = sadd.s32 1, %s13
    $region7: #{enforce_sym.1} parent=1 // loop_footer_branch
      %12 = sbr.rel target = $region3
    $region8: #{enforce_sym.1} parent=1 // loop_exit
      _
    %335 = vsyncpa [#allocation3], 1
    %s336 = scalar_lea.sflag [#allocation3], 1
    %337 = vsyncpa %s336, 1
    %338 = vsyncpa [#allocation4], 1
    %s339 = scalar_lea.sflag [#allocation4], 1
    %340 = vsyncpa %s339, 1

</llo_original>
